<compile_context>
chip_gen: v6e
topology: v6e:2x2x1
jax: 0.10.0
libtpu: 0.0.40
codegen_flags: <defaults>
</compile_context>

<pallas_src>
import jax
import jax.numpy as jnp
import numpy as np
from jax.experimental import pallas as pl
from jax.experimental.pallas import tpu as pltpu

_BN_EPS = 1e-5


# -----------------------------------------------------------------------------
# Single fused kernel for the whole forward pass.
# Ref order: x, adj, [mlp (w,b)]*n_mlp, g1_w, g1_b, g2_w, g2_b,
#            [graph-enc (w,b)]*n_genc, c1_wa, c1_wb, c1_b, out
# -----------------------------------------------------------------------------
def _make_fused_forward_kernel(n_mlp, n_genc):
    def kernel(*refs):
        x_ref, adj_ref = refs[0], refs[1]
        rest = list(refs[2:])
        o_ref = rest.pop()                       # output ref is last (no scratch)

        idx = 0

        def take_pair():
            nonlocal idx
            w, b = rest[idx], rest[idx + 1]
            idx += 2
            return w, b

        mlp_wb = [take_pair() for _ in range(n_mlp)]
        g1_w, g1_b = take_pair()
        g2_w, g2_b = take_pair()
        genc_wb = [take_pair() for _ in range(n_genc)]
        c1_wa, c1_wb, c1_b = rest[idx], rest[idx + 1], rest[idx + 2]

        x = x_ref[...]
        adj = adj_ref[...]

        def lin_relu(v, w_ref, b_ref):
            y = jnp.dot(v, w_ref[...], preferred_element_type=jnp.float32)
            return jnp.maximum(y + b_ref[...], 0.0)

        # --- mlp trunk: (Linear + folded-BN + ReLU) chain ---
        z1 = x
        for w_ref, b_ref in mlp_wb:
            z1 = lin_relu(z1, w_ref, b_ref)

        # --- graph trunk: two graphlayers then encoder chain ---
        h = jnp.dot(x, adj, preferred_element_type=jnp.float32)   # torch.spmm
        h = lin_relu(h, g1_w, g1_b)
        h = jnp.dot(h, adj, preferred_element_type=jnp.float32)
        h = lin_relu(h, g2_w, g2_b)
        z2 = h
        for w_ref, b_ref in genc_wb:
            z2 = lin_relu(z2, w_ref, b_ref)

        # --- head: c1(concat([z1, z2])) without materializing the concat ---
        z = (jnp.dot(z1, c1_wa[...], preferred_element_type=jnp.float32)
             + jnp.dot(z2, c1_wb[...], preferred_element_type=jnp.float32)
             + c1_b[...])
        o_ref[...] = jnp.maximum(z, 0.0).astype(o_ref.dtype)

    return kernel


def graph_mlp_forward(params, x, adj):
    """Full GraphMlpModel forward in one pallas_call (all operands in VMEM)."""
    flat = []
    for (w, b) in params["mlp_trunk"]:
        flat += [w, b]
    flat += [params["g1"][0], params["g1"][1],
             params["g2"][0], params["g2"][1]]
    for (w, b) in params["graph_enc"]:
        flat += [w, b]
    flat += [params["c1_wa"], params["c1_wb"], params["c1_b"]]

    n_mlp = len(params["mlp_trunk"])
    n_genc = len(params["graph_enc"])
    M = x.shape[0]
    n_out = params["c1_wa"].shape[1]

    kernel = _make_fused_forward_kernel(n_mlp, n_genc)
    vmem_spec = pl.BlockSpec(memory_space=pltpu.MemorySpace.VMEM)
    n_inputs = 2 + len(flat)

    return pl.pallas_call(
        kernel,
        out_shape=jax.ShapeDtypeStruct((M, n_out), jnp.float32),
        in_specs=[vmem_spec] * n_inputs,
        out_specs=vmem_spec,
    )(x, adj, *flat)


# -----------------------------------------------------------------------------
# Parameter construction (deterministic; eval-mode BatchNorm folded into W, b)
# -----------------------------------------------------------------------------
def _make_linear(key, in_dim, out_dim):
    kw, kb = jax.random.split(key)
    bound = 1.0 / np.sqrt(in_dim)
    w = jax.random.uniform(kw, (in_dim, out_dim), jnp.float32, -bound, bound)
    b = jax.random.uniform(kb, (out_dim,), jnp.float32, -bound, bound)
    return w, b


def _make_bn(key, dim):
    k1, k2, k3, k4 = jax.random.split(key, 4)
    gamma = 1.0 + 0.1 * jax.random.normal(k1, (dim,), jnp.float32)
    beta = 0.1 * jax.random.normal(k2, (dim,), jnp.float32)
    run_mean = 0.1 * jax.random.normal(k3, (dim,), jnp.float32)
    run_var = 0.5 + jnp.abs(jax.random.normal(k4, (dim,), jnp.float32))
    return gamma, beta, run_mean, run_var


def _fold_linear_bn(lin, bn):
    """Fold eval-mode BN into the Linear -> (w_eff, b_eff[1, N])."""
    w, b = lin
    gamma, beta, mean, var = bn
    s = gamma / jnp.sqrt(var + _BN_EPS)
    w_eff = (w * s[None, :]).astype(jnp.float32)
    b_eff = ((b - mean) * s + beta).reshape(1, -1).astype(jnp.float32)
    return w_eff, b_eff


def _make_mlp_block_params(key, dims):
    """List of (w_eff, b_eff) for Linear+BN(+ReLU)(+Dropout) stacks."""
    params = []
    for i in range(len(dims) - 1):
        key, k1, k2 = jax.random.split(key, 3)
        lin = _make_linear(k1, dims[i], dims[i + 1])
        bn = _make_bn(k2, dims[i + 1])
        params.append(_fold_linear_bn(lin, bn))
    return params


def init_graph_mlp_params(key, input_dim, graph_dim, mlp_hid_dims,
                          graph_hid_dims):
    keys = jax.random.split(key, 6)
    params = {}
    # mlp_trunk: Encoder2 -> MLP(input_dim, mlp_hid_dims)
    params["mlp_trunk"] = _make_mlp_block_params(
        keys[0], [input_dim] + list(mlp_hid_dims))
    # graph_trunk: g1, g2 (Linear + ReLU, no BN), then MLP-style encoder
    g1_w, g1_b = _make_linear(keys[1], input_dim, graph_dim)
    g2_w, g2_b = _make_linear(keys[2], graph_dim, graph_dim)
    params["g1"] = (g1_w, g1_b.reshape(1, -1))
    params["g2"] = (g2_w, g2_b.reshape(1, -1))
    params["graph_enc"] = _make_mlp_block_params(
        keys[3], [graph_dim] + list(graph_hid_dims))
    # c1: Linear(mlp_hid[-1] + graph_hid[-1] -> mlp_hid[-1]) + BN + ReLU,
    # split along the input axis so the kernel never materializes the concat.
    d1 = mlp_hid_dims[-1]
    c1_in = mlp_hid_dims[-1] + graph_hid_dims[-1]
    lin = _make_linear(keys[4], c1_in, mlp_hid_dims[-1])
    bn = _make_bn(keys[5], mlp_hid_dims[-1])
    c1_w, c1_b = _fold_linear_bn(lin, bn)
    params["c1_wa"] = c1_w[:d1, :]
    params["c1_wb"] = c1_w[d1:, :]
    params["c1_b"] = c1_b
    return params


# -----------------------------------------------------------------------------
# Pure-JAX reference (same eval-mode semantics, uses the explicit concat)
# -----------------------------------------------------------------------------
def graph_mlp_reference(params, x, adj):
    def block(plist, v):
        for (w, b) in plist:
            v = jnp.maximum(v @ w + b, 0.0)
        return v

    z1 = block(params["mlp_trunk"], x)
    g1_w, g1_b = params["g1"]
    h = jnp.maximum((x @ adj) @ g1_w + g1_b, 0.0)
    g2_w, g2_b = params["g2"]
    h = jnp.maximum((h @ adj) @ g2_w + g2_b, 0.0)
    z2 = block(params["graph_enc"], h)
    combine = jnp.concatenate([z1, z2], axis=1)
    c1_w = jnp.concatenate([params["c1_wa"], params["c1_wb"]], axis=0)
    return jnp.maximum(combine @ c1_w + params["c1_b"], 0.0)


# -----------------------------------------------------------------------------
if __name__ == "__main__":
    # NOTE: graphlayer applies `x @ adj` before Linear on BOTH layers, which is
    # only shape-consistent when graph_dim == input_dim (adj is square over the
    # feature axis). We honor the reference code literally.
    batch = 8
    input_dim = 16
    graph_dim = 16
    mlp_hid_dims = [32, 16]
    graph_hid_dims = [32, 8]

    root = jax.random.PRNGKey(0)
    k_params, k_x, k_adj = jax.random.split(root, 3)

    params = init_graph_mlp_params(k_params, input_dim, graph_dim,
                                   mlp_hid_dims, graph_hid_dims)
    x = jax.random.normal(k_x, (batch, input_dim), jnp.float32)
    adj = jax.random.uniform(k_adj, (input_dim, input_dim), jnp.float32)

    fwd = jax.jit(graph_mlp_forward)
    out = jax.block_until_ready(fwd(params, x, adj))

    ref = graph_mlp_reference(params, x, adj)
    assert out.shape == (batch, mlp_hid_dims[-1])
    np.testing.assert_allclose(np.asarray(out), np.asarray(ref),
                               rtol=1e-5, atol=1e-5)
    print("KERNEL_OK")
</pallas_src>

<mosaic_0001>
module attributes {stable_mosaic.version = 11 : i64} {
  func.func @kernel(%arg0: memref<8x16xf32, #tpu.memory_space<vmem>>, %arg1: memref<16x16xf32, #tpu.memory_space<vmem>>, %arg2: memref<16x32xf32, #tpu.memory_space<vmem>>, %arg3: memref<1x32xf32, #tpu.memory_space<vmem>>, %arg4: memref<32x16xf32, #tpu.memory_space<vmem>>, %arg5: memref<1x16xf32, #tpu.memory_space<vmem>>, %arg6: memref<16x16xf32, #tpu.memory_space<vmem>>, %arg7: memref<1x16xf32, #tpu.memory_space<vmem>>, %arg8: memref<16x16xf32, #tpu.memory_space<vmem>>, %arg9: memref<1x16xf32, #tpu.memory_space<vmem>>, %arg10: memref<16x32xf32, #tpu.memory_space<vmem>>, %arg11: memref<1x32xf32, #tpu.memory_space<vmem>>, %arg12: memref<32x8xf32, #tpu.memory_space<vmem>>, %arg13: memref<1x8xf32, #tpu.memory_space<vmem>>, %arg14: memref<16x16xf32, #tpu.memory_space<vmem>>, %arg15: memref<8x16xf32, #tpu.memory_space<vmem>>, %arg16: memref<1x16xf32, #tpu.memory_space<vmem>>, %arg17: memref<8x16xf32, #tpu.memory_space<vmem>>) attributes {dimension_semantics = [], scalar_prefetch = 0 : i64, scratch_operands = 0 : i64, tpu.core_type = #tpu.core_type<tc>} {
    %c0 = arith.constant 0 : index
    %c0_0 = arith.constant 0 : index
    %0 = vector.load %arg0[%c0, %c0_0] : memref<8x16xf32, #tpu.memory_space<vmem>>, vector<8x16xf32>
    %c0_1 = arith.constant 0 : index
    %c0_2 = arith.constant 0 : index
    %1 = vector.load %arg1[%c0_1, %c0_2] : memref<16x16xf32, #tpu.memory_space<vmem>>, vector<16x16xf32>
    %c0_3 = arith.constant 0 : index
    %c0_4 = arith.constant 0 : index
    %2 = vector.load %arg2[%c0_3, %c0_4] : memref<16x32xf32, #tpu.memory_space<vmem>>, vector<16x32xf32>
    %cst = arith.constant dense<0.000000e+00> : vector<8x32xf32>
    %3 = tpu.matmul %0, %2, %cst {dimension_numbers = #tpu.dot_dimension_numbers<[1], [0], [0], [1], [0, 0, 1, 1], [], []>} : vector<8x16xf32>, vector<16x32xf32>, vector<8x32xf32> -> vector<8x32xf32>
    %c0_5 = arith.constant 0 : index
    %c0_6 = arith.constant 0 : index
    %4 = vector.load %arg3[%c0_5, %c0_6] : memref<1x32xf32, #tpu.memory_space<vmem>>, vector<1x32xf32>
    %5 = vector.broadcast %4 : vector<1x32xf32> to vector<8x32xf32>
    %6 = arith.addf %3, %5 : vector<8x32xf32>
    %cst_7 = arith.constant 0.000000e+00 : f32
    %7 = vector.broadcast %cst_7 : f32 to vector<8x32xf32>
    %8 = arith.maximumf %6, %7 : vector<8x32xf32>
    %c0_8 = arith.constant 0 : index
    %c0_9 = arith.constant 0 : index
    %9 = vector.load %arg4[%c0_8, %c0_9] : memref<32x16xf32, #tpu.memory_space<vmem>>, vector<32x16xf32>
    %cst_10 = arith.constant dense<0.000000e+00> : vector<8x16xf32>
    %10 = tpu.matmul %8, %9, %cst_10 {dimension_numbers = #tpu.dot_dimension_numbers<[1], [0], [0], [1], [0, 0, 1, 1], [], []>} : vector<8x32xf32>, vector<32x16xf32>, vector<8x16xf32> -> vector<8x16xf32>
    %c0_11 = arith.constant 0 : index
    %c0_12 = arith.constant 0 : index
    %11 = vector.load %arg5[%c0_11, %c0_12] : memref<1x16xf32, #tpu.memory_space<vmem>>, vector<1x16xf32>
    %12 = vector.broadcast %11 : vector<1x16xf32> to vector<8x16xf32>
    %13 = arith.addf %10, %12 : vector<8x16xf32>
    %cst_13 = arith.constant 0.000000e+00 : f32
    %14 = vector.broadcast %cst_13 : f32 to vector<8x16xf32>
    %15 = arith.maximumf %13, %14 : vector<8x16xf32>
    %cst_14 = arith.constant dense<0.000000e+00> : vector<8x16xf32>
    %16 = tpu.matmul %0, %1, %cst_14 {dimension_numbers = #tpu.dot_dimension_numbers<[1], [0], [0], [1], [0, 0, 1, 1], [], []>} : vector<8x16xf32>, vector<16x16xf32>, vector<8x16xf32> -> vector<8x16xf32>
    %c0_15 = arith.constant 0 : index
    %c0_16 = arith.constant 0 : index
    %17 = vector.load %arg6[%c0_15, %c0_16] : memref<16x16xf32, #tpu.memory_space<vmem>>, vector<16x16xf32>
    %cst_17 = arith.constant dense<0.000000e+00> : vector<8x16xf32>
    %18 = tpu.matmul %16, %17, %cst_17 {dimension_numbers = #tpu.dot_dimension_numbers<[1], [0], [0], [1], [0, 0, 1, 1], [], []>} : vector<8x16xf32>, vector<16x16xf32>, vector<8x16xf32> -> vector<8x16xf32>
    %c0_18 = arith.constant 0 : index
    %c0_19 = arith.constant 0 : index
    %19 = vector.load %arg7[%c0_18, %c0_19] : memref<1x16xf32, #tpu.memory_space<vmem>>, vector<1x16xf32>
    %20 = vector.broadcast %19 : vector<1x16xf32> to vector<8x16xf32>
    %21 = arith.addf %18, %20 : vector<8x16xf32>
    %cst_20 = arith.constant 0.000000e+00 : f32
    %22 = vector.broadcast %cst_20 : f32 to vector<8x16xf32>
    %23 = arith.maximumf %21, %22 : vector<8x16xf32>
    %cst_21 = arith.constant dense<0.000000e+00> : vector<8x16xf32>
    %24 = tpu.matmul %23, %1, %cst_21 {dimension_numbers = #tpu.dot_dimension_numbers<[1], [0], [0], [1], [0, 0, 1, 1], [], []>} : vector<8x16xf32>, vector<16x16xf32>, vector<8x16xf32> -> vector<8x16xf32>
    %c0_22 = arith.constant 0 : index
    %c0_23 = arith.constant 0 : index
    %25 = vector.load %arg8[%c0_22, %c0_23] : memref<16x16xf32, #tpu.memory_space<vmem>>, vector<16x16xf32>
    %cst_24 = arith.constant dense<0.000000e+00> : vector<8x16xf32>
    %26 = tpu.matmul %24, %25, %cst_24 {dimension_numbers = #tpu.dot_dimension_numbers<[1], [0], [0], [1], [0, 0, 1, 1], [], []>} : vector<8x16xf32>, vector<16x16xf32>, vector<8x16xf32> -> vector<8x16xf32>
    %c0_25 = arith.constant 0 : index
    %c0_26 = arith.constant 0 : index
    %27 = vector.load %arg9[%c0_25, %c0_26] : memref<1x16xf32, #tpu.memory_space<vmem>>, vector<1x16xf32>
    %28 = vector.broadcast %27 : vector<1x16xf32> to vector<8x16xf32>
    %29 = arith.addf %26, %28 : vector<8x16xf32>
    %cst_27 = arith.constant 0.000000e+00 : f32
    %30 = vector.broadcast %cst_27 : f32 to vector<8x16xf32>
    %31 = arith.maximumf %29, %30 : vector<8x16xf32>
    %c0_28 = arith.constant 0 : index
    %c0_29 = arith.constant 0 : index
    %32 = vector.load %arg10[%c0_28, %c0_29] : memref<16x32xf32, #tpu.memory_space<vmem>>, vector<16x32xf32>
    %cst_30 = arith.constant dense<0.000000e+00> : vector<8x32xf32>
    %33 = tpu.matmul %31, %32, %cst_30 {dimension_numbers = #tpu.dot_dimension_numbers<[1], [0], [0], [1], [0, 0, 1, 1], [], []>} : vector<8x16xf32>, vector<16x32xf32>, vector<8x32xf32> -> vector<8x32xf32>
    %c0_31 = arith.constant 0 : index
    %c0_32 = arith.constant 0 : index
    %34 = vector.load %arg11[%c0_31, %c0_32] : memref<1x32xf32, #tpu.memory_space<vmem>>, vector<1x32xf32>
    %35 = vector.broadcast %34 : vector<1x32xf32> to vector<8x32xf32>
    %36 = arith.addf %33, %35 : vector<8x32xf32>
    %cst_33 = arith.constant 0.000000e+00 : f32
    %37 = vector.broadcast %cst_33 : f32 to vector<8x32xf32>
    %38 = arith.maximumf %36, %37 : vector<8x32xf32>
    %c0_34 = arith.constant 0 : index
    %c0_35 = arith.constant 0 : index
    %39 = vector.load %arg12[%c0_34, %c0_35] : memref<32x8xf32, #tpu.memory_space<vmem>>, vector<32x8xf32>
    %cst_36 = arith.constant dense<0.000000e+00> : vector<8x8xf32>
    %40 = tpu.matmul %38, %39, %cst_36 {dimension_numbers = #tpu.dot_dimension_numbers<[1], [0], [0], [1], [0, 0, 1, 1], [], []>} : vector<8x32xf32>, vector<32x8xf32>, vector<8x8xf32> -> vector<8x8xf32>
    %c0_37 = arith.constant 0 : index
    %c0_38 = arith.constant 0 : index
    %41 = vector.load %arg13[%c0_37, %c0_38] : memref<1x8xf32, #tpu.memory_space<vmem>>, vector<1x8xf32>
    %42 = vector.broadcast %41 : vector<1x8xf32> to vector<8x8xf32>
    %43 = arith.addf %40, %42 : vector<8x8xf32>
    %cst_39 = arith.constant 0.000000e+00 : f32
    %44 = vector.broadcast %cst_39 : f32 to vector<8x8xf32>
    %45 = arith.maximumf %43, %44 : vector<8x8xf32>
    %c0_40 = arith.constant 0 : index
    %c0_41 = arith.constant 0 : index
    %46 = vector.load %arg14[%c0_40, %c0_41] : memref<16x16xf32, #tpu.memory_space<vmem>>, vector<16x16xf32>
    %cst_42 = arith.constant dense<0.000000e+00> : vector<8x16xf32>
    %47 = tpu.matmul %15, %46, %cst_42 {dimension_numbers = #tpu.dot_dimension_numbers<[1], [0], [0], [1], [0, 0, 1, 1], [], []>} : vector<8x16xf32>, vector<16x16xf32>, vector<8x16xf32> -> vector<8x16xf32>
    %c0_43 = arith.constant 0 : index
    %c0_44 = arith.constant 0 : index
    %48 = vector.load %arg15[%c0_43, %c0_44] : memref<8x16xf32, #tpu.memory_space<vmem>>, vector<8x16xf32>
    %cst_45 = arith.constant dense<0.000000e+00> : vector<8x16xf32>
    %49 = tpu.matmul %45, %48, %cst_45 {dimension_numbers = #tpu.dot_dimension_numbers<[1], [0], [0], [1], [0, 0, 1, 1], [], []>} : vector<8x8xf32>, vector<8x16xf32>, vector<8x16xf32> -> vector<8x16xf32>
    %50 = arith.addf %47, %49 : vector<8x16xf32>
    %c0_46 = arith.constant 0 : index
    %c0_47 = arith.constant 0 : index
    %51 = vector.load %arg16[%c0_46, %c0_47] : memref<1x16xf32, #tpu.memory_space<vmem>>, vector<1x16xf32>
    %52 = vector.broadcast %51 : vector<1x16xf32> to vector<8x16xf32>
    %53 = arith.addf %50, %52 : vector<8x16xf32>
    %cst_48 = arith.constant 0.000000e+00 : f32
    %54 = vector.broadcast %cst_48 : f32 to vector<8x16xf32>
    %55 = arith.maximumf %53, %54 : vector<8x16xf32>
    %c0_49 = arith.constant 0 : index
    %c0_50 = arith.constant 0 : index
    %56 = vector.load %arg17[%c0_49, %c0_50] : memref<8x16xf32, #tpu.memory_space<vmem>>, vector<8x16xf32>
    tpu.vector_store %arg17[%c0_49, %c0_50], %55 {strides = array<i32>} : memref<8x16xf32, #tpu.memory_space<vmem>>, vector<8x16xf32>,
    return
  }
}

</mosaic_0001>

<llo_original>
// kernel: graph_mlp_forward.1
$region0: #{graph_mlp_forward.1}
  #allocation0 [shape = 'u32[]', space=smem, size = 0x4, offset = 0x4, fixed_abs, tag = 'smem constant byte address 0x4 - core index']
  #allocation1 [shape = 'u32[144,128]{1,0:T(1,128)}', space=vmem, size = 0x12000, scoped, tag = 'internal scratch']
  %s0 = inlined_call_operand.vmem [shape: f32[8,16], index: 0, kind: input, shape index: {}]
  %s1 = inlined_call_operand.vmem [shape: f32[16,16], index: 1, kind: input, shape index: {}]
  %s2 = inlined_call_operand.vmem [shape: f32[16,32], index: 2, kind: input, shape index: {}]
  %s3 = inlined_call_operand.vmem [shape: f32[1,32], index: 3, kind: input, shape index: {}]
  %s4 = inlined_call_operand.vmem [shape: f32[32,16], index: 4, kind: input, shape index: {}]
  %s5 = inlined_call_operand.hbm [shape: f32[1,16], index: 5, kind: input, shape index: {}]
  %s6 = inlined_call_operand.vmem [shape: f32[16,16], index: 6, kind: input, shape index: {}]
  %s7 = inlined_call_operand.hbm [shape: f32[1,16], index: 7, kind: input, shape index: {}]
  %s8 = inlined_call_operand.vmem [shape: f32[16,16], index: 8, kind: input, shape index: {}]
  %s9 = inlined_call_operand.hbm [shape: f32[1,16], index: 9, kind: input, shape index: {}]
  %s10 = inlined_call_operand.vmem [shape: f32[16,32], index: 10, kind: input, shape index: {}]
  %s11 = inlined_call_operand.hbm [shape: f32[1,32], index: 11, kind: input, shape index: {}]
  %s12 = inlined_call_operand.vmem [shape: f32[32,8], index: 12, kind: input, shape index: {}]
  %s13 = inlined_call_operand.hbm [shape: f32[1,8], index: 13, kind: input, shape index: {}]
  %s14 = inlined_call_operand.hbm [shape: f32[16,16], index: 14, kind: input, shape index: {}]
  %s15 = inlined_call_operand.hbm [shape: f32[8,16], index: 15, kind: input, shape index: {}]
  %s16 = inlined_call_operand.hbm [shape: f32[1,16], index: 16, kind: input, shape index: {}]
  %s17 = inlined_call_operand.hbm [shape: f32[8,16], index: 17, kind: output, shape index: {}]
  %s18 = sld [smem:[#allocation0]]
  $region110: #{graph_mlp_forward.1} parent=0
    _
  %s20 = ssub.s32 1, %s18
  %s21 = scalar_select 0, %s20, %s18
  $region1: #{graph_mlp_forward.1} parent=0
    #allocation2 [shape = 'u8[512]{0}', space=vmem, size = 0x400, scoped, tag = 'input window, operand 5, single buffered']
    #allocation3 [shape = 's32[1]{0}', space=sflag, size = 0x4, scoped, tag = 'scoped memory for graph_mlp_forward.1']
    #allocation4 [shape = 's32[1]{0}', space=sflag, size = 0x4, scoped, tag = 'scoped memory for graph_mlp_forward.1']
    #allocation5 [shape = 'u8[512]{0}', space=vmem, size = 0x400, scoped, tag = 'input window, operand 7, single buffered']
    #allocation6 [shape = 's32[1]{0}', space=sflag, size = 0x4, scoped, tag = 'scoped memory for graph_mlp_forward.1']
    #allocation7 [shape = 'u8[512]{0}', space=vmem, size = 0x400, scoped, tag = 'input window, operand 9, single buffered']
    #allocation8 [shape = 'u8[512]{0}', space=vmem, size = 0x400, scoped, tag = 'input window, operand 11, single buffered']
    #allocation9 [shape = 's32[1]{0}', space=sflag, size = 0x4, scoped, tag = 'scoped memory for graph_mlp_forward.1']
    #allocation10 [shape = 'u8[512]{0}', space=vmem, size = 0x400, scoped, tag = 'input window, operand 13, single buffered']
    #allocation11 [shape = 'u8[8192]{0}', space=vmem, size = 0x2000, scoped, tag = 'input window, operand 14, single buffered']
    #allocation12 [shape = 's32[1]{0}', space=sflag, size = 0x4, scoped, tag = 'scoped memory for graph_mlp_forward.1']
    #allocation13 [shape = 'u8[4096]{0}', space=vmem, size = 0x1000, scoped, tag = 'input window, operand 15, single buffered']
    #allocation14 [shape = 'u8[512]{0}', space=vmem, size = 0x400, scoped, tag = 'input window, operand 16, single buffered']
    #allocation15 [shape = 's32[1]{0}', space=sflag, size = 0x4, scoped, tag = 'scoped memory for graph_mlp_forward.1']
    #allocation16 [shape = 'u8[4096]{0}', space=vmem, size = 0x1000, scoped, tag = 'output window, operand 0, single buffered']
    %22 = vsyncpa [#allocation3], 0
    %23 = vsyncpa [#allocation6], 0
    %24 = vsyncpa [#allocation9], 0
    %25 = vsyncpa [#allocation12], 0
    %26 = vsyncpa [#allocation15], 0
    %27 = vsyncpa [#allocation4], 0
    // Predicated region
    $region2: #{graph_mlp_forward.1} parent=1 // pred_check
      _
    $region3: #{graph_mlp_forward.1} parent=1 // pred_check_branch
      %29 = sbr.rel (0) target = $region5
    $region4: #{graph_mlp_forward.1} parent=1 // pred_region
      _
    $region5: #{graph_mlp_forward.1} parent=1 // pred_fallthru
      _
    // Predicated region
    $region6: #{graph_mlp_forward.1} parent=1 // pred_check
      _
    $region7: #{graph_mlp_forward.1} parent=1 // pred_check_branch
      %31 = sbr.rel (0) target = $region9
    $region8: #{graph_mlp_forward.1} parent=1 // pred_region
      _
    $region9: #{graph_mlp_forward.1} parent=1 // pred_fallthru
      _
    // Predicated region
    $region10: #{graph_mlp_forward.1} parent=1 // pred_check
      _
    $region11: #{graph_mlp_forward.1} parent=1 // pred_check_branch
      %33 = sbr.rel (0) target = $region13
    $region12: #{graph_mlp_forward.1} parent=1 // pred_region
      _
    $region13: #{graph_mlp_forward.1} parent=1 // pred_fallthru
      _
    // Predicated region
    $region14: #{graph_mlp_forward.1} parent=1 // pred_check
      _
    $region15: #{graph_mlp_forward.1} parent=1 // pred_check_branch
      %35 = sbr.rel (0) target = $region17
    $region16: #{graph_mlp_forward.1} parent=1 // pred_region
      _
    $region17: #{graph_mlp_forward.1} parent=1 // pred_fallthru
      _
    // Predicated region
    $region18: #{graph_mlp_forward.1} parent=1 // pred_check
      _
    $region19: #{graph_mlp_forward.1} parent=1 // pred_check_branch
      %37 = sbr.rel (0) target = $region21
    $region20: #{graph_mlp_forward.1} parent=1 // pred_region
      _
    $region21: #{graph_mlp_forward.1} parent=1 // pred_fallthru
      _
    // Predicated region
    $region22: #{graph_mlp_forward.1} parent=1 // pred_check
      _
    $region23: #{graph_mlp_forward.1} parent=1 // pred_check_branch
      %39 = sbr.rel (0) target = $region25
    $region24: #{graph_mlp_forward.1} parent=1 // pred_region
      %s41 = ssub.s32 16, 16
      %42 = vsyncadd [#allocation3], %s41
      %s44 = sshll.u32 [#allocation2], 4
      %s45 = int_to_ptr.vmem [resolvable:$true] %s44
      %47 = dma.hbm_to_vmem [thread:$0]  %s5, 16, %s45, [#allocation3]
    $region25: #{graph_mlp_forward.1} parent=1 // pred_fallthru
      _
    // Predicated region
    $region26: #{graph_mlp_forward.1} parent=1 // pred_check
      _
    $region27: #{graph_mlp_forward.1} parent=1 // pred_check_branch
      %49 = sbr.rel (0) target = $region29
    $region28: #{graph_mlp_forward.1} parent=1 // pred_region
      _
    $region29: #{graph_mlp_forward.1} parent=1 // pred_fallthru
      _
    // Predicated region
    $region30: #{graph_mlp_forward.1} parent=1 // pred_check
      _
    $region31: #{graph_mlp_forward.1} parent=1 // pred_check_branch
      %51 = sbr.rel (0) target = $region33
    $region32: #{graph_mlp_forward.1} parent=1 // pred_region
      %s53 = ssub.s32 16, 16
      %54 = vsyncadd [#allocation6], %s53
      %s56 = sshll.u32 [#allocation5], 4
      %s57 = int_to_ptr.vmem [resolvable:$true] %s56
      %59 = dma.hbm_to_vmem [thread:$0]  %s7, 16, %s57, [#allocation6]
    $region33: #{graph_mlp_forward.1} parent=1 // pred_fallthru
      _
    // Predicated region
    $region34: #{graph_mlp_forward.1} parent=1 // pred_check
      _
    $region35: #{graph_mlp_forward.1} parent=1 // pred_check_branch
      %61 = sbr.rel (0) target = $region37
    $region36: #{graph_mlp_forward.1} parent=1 // pred_region
      _
    $region37: #{graph_mlp_forward.1} parent=1 // pred_fallthru
      _
    // Predicated region
    $region38: #{graph_mlp_forward.1} parent=1 // pred_check
      _
    $region39: #{graph_mlp_forward.1} parent=1 // pred_check_branch
      %63 = sbr.rel (0) target = $region41
    $region40: #{graph_mlp_forward.1} parent=1 // pred_region
      %s65 = ssub.s32 16, 16
      %66 = vsyncadd [#allocation6], %s65
      %s68 = sshll.u32 [#allocation7], 4
      %s69 = int_to_ptr.vmem [resolvable:$true] %s68
      %71 = dma.hbm_to_vmem [thread:$0]  %s9, 16, %s69, [#allocation6]
    $region41: #{graph_mlp_forward.1} parent=1 // pred_fallthru
      _
    // Predicated region
    $region42: #{graph_mlp_forward.1} parent=1 // pred_check
      _
    $region43: #{graph_mlp_forward.1} parent=1 // pred_check_branch
      %73 = sbr.rel (0) target = $region45
    $region44: #{graph_mlp_forward.1} parent=1 // pred_region
      _
    $region45: #{graph_mlp_forward.1} parent=1 // pred_fallthru
      _
    // Predicated region
    $region46: #{graph_mlp_forward.1} parent=1 // pred_check
      _
    $region47: #{graph_mlp_forward.1} parent=1 // pred_check_branch
      %75 = sbr.rel (0) target = $region49
    $region48: #{graph_mlp_forward.1} parent=1 // pred_region
      %s77 = ssub.s32 16, 16
      %78 = vsyncadd [#allocation9], %s77
      %s80 = sshll.u32 [#allocation8], 4
      %s81 = int_to_ptr.vmem [resolvable:$true] %s80
      %83 = dma.hbm_to_vmem [thread:$0]  %s11, 16, %s81, [#allocation9]
    $region49: #{graph_mlp_forward.1} parent=1 // pred_fallthru
      _
    // Predicated region
    $region50: #{graph_mlp_forward.1} parent=1 // pred_check
      _
    $region51: #{graph_mlp_forward.1} parent=1 // pred_check_branch
      %85 = sbr.rel (0) target = $region53
    $region52: #{graph_mlp_forward.1} parent=1 // pred_region
      _
    $region53: #{graph_mlp_forward.1} parent=1 // pred_fallthru
      _
    // Predicated region
    $region54: #{graph_mlp_forward.1} parent=1 // pred_check
      _
    $region55: #{graph_mlp_forward.1} parent=1 // pred_check_branch
      %87 = sbr.rel (0) target = $region57
    $region56: #{graph_mlp_forward.1} parent=1 // pred_region
      %s89 = ssub.s32 16, 16
      %90 = vsyncadd [#allocation9], %s89
      %s92 = sshll.u32 [#allocation10], 4
      %s93 = int_to_ptr.vmem [resolvable:$true] %s92
      %95 = dma.hbm_to_vmem [thread:$0]  %s13, 16, %s93, [#allocation9]
    $region57: #{graph_mlp_forward.1} parent=1 // pred_fallthru
      _
    // Predicated region
    $region58: #{graph_mlp_forward.1} parent=1 // pred_check
      _
    $region59: #{graph_mlp_forward.1} parent=1 // pred_check_branch
      %97 = sbr.rel (0) target = $region61
    $region60: #{graph_mlp_forward.1} parent=1 // pred_region
      %s99 = ssub.s32 256, 256
      %100 = vsyncadd [#allocation12], %s99
      %s101 = sshll.u32 [#allocation11], 4
      %s102 = int_to_ptr.vmem [resolvable:$true] %s101
      %107 = dma.hbm_to_vmem [thread:$0]  %s14, 256, %s102, [#allocation12], 128, 128, 8
    $region61: #{graph_mlp_forward.1} parent=1 // pred_fallthru
      _
    // Predicated region
    $region62: #{graph_mlp_forward.1} parent=1 // pred_check
      _
    $region63: #{graph_mlp_forward.1} parent=1 // pred_check_branch
      %109 = sbr.rel (0) target = $region65
    $region64: #{graph_mlp_forward.1} parent=1 // pred_region
      %s111 = ssub.s32 128, 128
      %112 = vsyncadd [#allocation12], %s111
      %s114 = sshll.u32 [#allocation13], 4
      %s115 = int_to_ptr.vmem [resolvable:$true] %s114
      %117 = dma.hbm_to_vmem [thread:$0]  %s15, 128, %s115, [#allocation12]
    $region65: #{graph_mlp_forward.1} parent=1 // pred_fallthru
      _
    // Predicated region
    $region66: #{graph_mlp_forward.1} parent=1 // pred_check
      _
    $region67: #{graph_mlp_forward.1} parent=1 // pred_check_branch
      %119 = sbr.rel (0) target = $region69
    $region68: #{graph_mlp_forward.1} parent=1 // pred_region
      %s121 = ssub.s32 16, 16
      %122 = vsyncadd [#allocation15], %s121
      %s124 = sshll.u32 [#allocation14], 4
      %s125 = int_to_ptr.vmem [resolvable:$true] %s124
      %127 = dma.hbm_to_vmem [thread:$0]  %s16, 16, %s125, [#allocation15]
    $region69: #{graph_mlp_forward.1} parent=1 // pred_fallthru
      _
    // Predicated region
    $region70: #{graph_mlp_forward.1} parent=1 // pred_check
      _
    $region71: #{graph_mlp_forward.1} parent=1 // pred_check_branch
      %129 = sbr.rel (0) target = $region73
    $region72: #{graph_mlp_forward.1} parent=1 // pred_region
      %130 = dma.done [#allocation3], 16
    $region73: #{graph_mlp_forward.1} parent=1 // pred_fallthru
      _
    // Predicated region
    $region74: #{graph_mlp_forward.1} parent=1 // pred_check
      _
    $region75: #{graph_mlp_forward.1} parent=1 // pred_check_branch
      %132 = sbr.rel (0) target = $region77
    $region76: #{graph_mlp_forward.1} parent=1 // pred_region
      %133 = dma.done [#allocation6], 16
    $region77: #{graph_mlp_forward.1} parent=1 // pred_fallthru
      _
    // Predicated region
    $region78: #{graph_mlp_forward.1} parent=1 // pred_check
      _
    $region79: #{graph_mlp_forward.1} parent=1 // pred_check_branch
      %135 = sbr.rel (0) target = $region81
    $region80: #{graph_mlp_forward.1} parent=1 // pred_region
      %136 = dma.done [#allocation6], 16
    $region81: #{graph_mlp_forward.1} parent=1 // pred_fallthru
      _
    // Predicated region
    $region82: #{graph_mlp_forward.1} parent=1 // pred_check
      _
    $region83: #{graph_mlp_forward.1} parent=1 // pred_check_branch
      %138 = sbr.rel (0) target = $region85
    $region84: #{graph_mlp_forward.1} parent=1 // pred_region
      %139 = dma.done [#allocation9], 16
    $region85: #{graph_mlp_forward.1} parent=1 // pred_fallthru
      _
    // Predicated region
    $region86: #{graph_mlp_forward.1} parent=1 // pred_check
      _
    $region87: #{graph_mlp_forward.1} parent=1 // pred_check_branch
      %141 = sbr.rel (0) target = $region89
    $region88: #{graph_mlp_forward.1} parent=1 // pred_region
      %142 = dma.done [#allocation9], 16
    $region89: #{graph_mlp_forward.1} parent=1 // pred_fallthru
      _
    // Predicated region
    $region90: #{graph_mlp_forward.1} parent=1 // pred_check
      _
    $region91: #{graph_mlp_forward.1} parent=1 // pred_check_branch
      %144 = sbr.rel (0) target = $region93
    $region92: #{graph_mlp_forward.1} parent=1 // pred_region
      %145 = dma.done [#allocation12], 256
    $region93: #{graph_mlp_forward.1} parent=1 // pred_fallthru
      _
    // Predicated region
    $region94: #{graph_mlp_forward.1} parent=1 // pred_check
      _
    $region95: #{graph_mlp_forward.1} parent=1 // pred_check_branch
      %147 = sbr.rel (0) target = $region97
    $region96: #{graph_mlp_forward.1} parent=1 // pred_region
      %148 = dma.done [#allocation12], 128
    $region97: #{graph_mlp_forward.1} parent=1 // pred_fallthru
      _
    // Predicated region
    $region98: #{graph_mlp_forward.1} parent=1 // pred_check
      _
    $region99: #{graph_mlp_forward.1} parent=1 // pred_check_branch
      %150 = sbr.rel (0) target = $region101
    $region100: #{graph_mlp_forward.1} parent=1 // pred_region
      %151 = dma.done [#allocation15], 16
    $region101: #{graph_mlp_forward.1} parent=1 // pred_fallthru
      _
    %v152 = vld [vmem:[%s0] sm:$0xff]
    %v153 = vld [vmem:[%s1] sm:$0xff]
    %v154 = vld [vmem:[%s1 + $0x8] sm:$0xff]
    %v155 = vld [vmem:[%s2] sm:$0xff]
    %v156 = vld [vmem:[%s2 + $0x8] sm:$0xff]
    %v157 = vld [vmem:[%s3] sm:$0x1]
    %v159 = vlaneseq
    %v160 = vshrl.u32 %v159, 7
    %v161 = vsub.s32 0, %v160
    %v162 = vrot.slane %v157, %v161
    %vm164 = vcmask 130048
    %v166 = vsel %vm164, %v152, 0
    %168 = vmatprep.subr.mxu0 0.0
    %169 = vmatpush1.msra.mxu0 0.0
    %170 = vmatprep.subr.mxu0 0.0
    %171 = vmatpush1.msra.mxu0 0.0
    %172 = vmatprep.subr.mxu0 0.0
    %173 = vmatpush1.msra.mxu0 0.0
    %174 = vmatprep.subr.mxu0 0.0
    %175 = vmatpush1.msra.mxu0 0.0
    %176 = vmatprep.subr.mxu0 0.0
    %177 = vmatpush1.msra.mxu0 0.0
    %178 = vmatprep.subr.mxu0 0.0
    %179 = vmatpush1.msra.mxu0 0.0
    %180 = vmatprep.subr.mxu0 0.0
    %181 = vmatpush1.msra.mxu0 0.0
    %182 = vmatprep.subr.mxu0 0.0
    %183 = vmatpush1.msra.mxu0 0.0
    %184 = vmatprep.subr.mxu0 0.0
    %185 = vmatpush1.msra.mxu0 0.0
    %186 = vmatprep.subr.mxu0 0.0
    %187 = vmatpush1.msra.mxu0 0.0
    %188 = vmatprep.subr.mxu0 0.0
    %189 = vmatpush1.msra.mxu0 0.0
    %190 = vmatprep.subr.mxu0 0.0
    %191 = vmatpush1.msra.mxu0 0.0
    %192 = vmatprep.subr.mxu0 0.0
    %193 = vmatpush1.msra.mxu0 0.0
    %194 = vmatprep.subr.mxu0 0.0
    %195 = vmatpush1.msra.mxu0 0.0
    %196 = vmatprep.subr.mxu0 0.0
    %197 = vmatpush1.msra.mxu0 %v156
    %198 = vmatprep.subr.mxu0 0.0
    %199 = vmatpush1.msra.mxu0 %v155
    %200 = vmatprep.subr.mxu0 0.0
    %201 = vmatpush2.msra.mxu0 0.0
    %202 = vmatprep.subr.mxu0 0.0
    %203 = vmatpush2.msra.mxu0 0.0
    %204 = vmatprep.subr.mxu0 0.0
    %205 = vmatpush2.msra.mxu0 0.0
    %206 = vmatprep.subr.mxu0 0.0
    %207 = vmatpush2.msra.mxu0 0.0
    %208 = vmatprep.subr.mxu0 0.0
    %209 = vmatpush2.msra.mxu0 0.0
    %210 = vmatprep.subr.mxu0 0.0
    %211 = vmatpush2.msra.mxu0 0.0
    %212 = vmatprep.subr.mxu0 0.0
    %213 = vmatpush2.msra.mxu0 0.0
    %214 = vmatprep.subr.mxu0 0.0
    %215 = vmatpush2.msra.mxu0 0.0
    %216 = vmatprep.subr.mxu0 0.0
    %217 = vmatpush2.msra.mxu0 0.0
    %218 = vmatprep.subr.mxu0 0.0
    %219 = vmatpush2.msra.mxu0 0.0
    %220 = vmatprep.subr.mxu0 0.0
    %221 = vmatpush2.msra.mxu0 0.0
    %222 = vmatprep.subr.mxu0 0.0
    %223 = vmatpush2.msra.mxu0 0.0
    %224 = vmatprep.subr.mxu0 0.0
    %225 = vmatpush2.msra.mxu0 0.0
    %226 = vmatprep.subr.mxu0 0.0
    %227 = vmatpush2.msra.mxu0 0.0
    %228 = vmatprep.subr.mxu0 0.0
    %229 = vmatpush2.msra.mxu0 0.0
    %230 = vmatprep.subr.mxu0 0.0
    %231 = vmatpush2.msra.mxu0 0.0
    %232 = vmatprep.mubr.f32.mxu0 0.0
    %233 = vmatmul.mubr.f32.gmra.mxu0 %v166
    %v234 = vpop.f32.mrf.mxu0
    %v235 = vadd.f32 %v162, %v234
    %v236 = vpop.f32.mrf.mxu0
    %237 = vdwg.mxu0
    %v238 = vmax.f32 %v235, 0.0
    %v239 = vld [vmem:[%s4] sm:$0xff]
    %v240 = vld [vmem:[%s4 + $0x8] sm:$0xff]
    %v241 = vld [vmem:[%s4 + $0x10] sm:$0xff]
    %v242 = vld [vmem:[%s4 + $0x18] sm:$0xff]
    %v243 = vld [vmem:[#allocation2] sm:$0x1]
    %v245 = vlaneseq
    %v246 = vshrl.u32 %v245, 7
    %v247 = vsub.s32 0, %v246
    %v248 = vrot.slane %v243, %v247
    %vm250 = vcmask 261120
    %v252 = vsel %vm250, %v238, 0
    %254 = vmatprep.subr.mxu0 0.0
    %255 = vmatpush1.msra.mxu0 0.0
    %256 = vmatprep.subr.mxu0 0.0
    %257 = vmatpush1.msra.mxu0 0.0
    %258 = vmatprep.subr.mxu0 0.0
    %259 = vmatpush1.msra.mxu0 0.0
    %260 = vmatprep.subr.mxu0 0.0
    %261 = vmatpush1.msra.mxu0 0.0
    %262 = vmatprep.subr.mxu0 0.0
    %263 = vmatpush1.msra.mxu0 0.0
    %264 = vmatprep.subr.mxu0 0.0
    %265 = vmatpush1.msra.mxu0 0.0
    %266 = vmatprep.subr.mxu0 0.0
    %267 = vmatpush1.msra.mxu0 0.0
    %268 = vmatprep.subr.mxu0 0.0
    %269 = vmatpush1.msra.mxu0 0.0
    %270 = vmatprep.subr.mxu0 0.0
    %271 = vmatpush1.msra.mxu0 0.0
    %272 = vmatprep.subr.mxu0 0.0
    %273 = vmatpush1.msra.mxu0 0.0
    %274 = vmatprep.subr.mxu0 0.0
    %275 = vmatpush1.msra.mxu0 0.0
    %276 = vmatprep.subr.mxu0 0.0
    %277 = vmatpush1.msra.mxu0 0.0
    %278 = vmatprep.subr.mxu0 0.0
    %279 = vmatpush1.msra.mxu0 %v242
    %280 = vmatprep.subr.mxu0 0.0
    %281 = vmatpush1.msra.mxu0 %v241
    %282 = vmatprep.subr.mxu0 0.0
    %283 = vmatpush1.msra.mxu0 %v240
    %284 = vmatprep.subr.mxu0 0.0
    %285 = vmatpush1.msra.mxu0 %v239
    %286 = vmatprep.subr.mxu0 0.0
    %287 = vmatpush2.msra.mxu0 0.0
    %288 = vmatprep.subr.mxu0 0.0
    %289 = vmatpush2.msra.mxu0 0.0
    %290 = vmatprep.subr.mxu0 0.0
    %291 = vmatpush2.msra.mxu0 0.0
    %292 = vmatprep.subr.mxu0 0.0
    %293 = vmatpush2.msra.mxu0 0.0
    %294 = vmatprep.subr.mxu0 0.0
    %295 = vmatpush2.msra.mxu0 0.0
    %296 = vmatprep.subr.mxu0 0.0
    %297 = vmatpush2.msra.mxu0 0.0
    %298 = vmatprep.subr.mxu0 0.0
    %299 = vmatpush2.msra.mxu0 0.0
    %300 = vmatprep.subr.mxu0 0.0
    %301 = vmatpush2.msra.mxu0 0.0
    %302 = vmatprep.subr.mxu0 0.0
    %303 = vmatpush2.msra.mxu0 0.0
    %304 = vmatprep.subr.mxu0 0.0
    %305 = vmatpush2.msra.mxu0 0.0
    %306 = vmatprep.subr.mxu0 0.0
    %307 = vmatpush2.msra.mxu0 0.0
    %308 = vmatprep.subr.mxu0 0.0
    %309 = vmatpush2.msra.mxu0 0.0
    %310 = vmatprep.subr.mxu0 0.0
    %311 = vmatpush2.msra.mxu0 0.0
    %312 = vmatprep.subr.mxu0 0.0
    %313 = vmatpush2.msra.mxu0 0.0
    %314 = vmatprep.subr.mxu0 0.0
    %315 = vmatpush2.msra.mxu0 0.0
    %316 = vmatprep.subr.mxu0 0.0
    %317 = vmatpush2.msra.mxu0 0.0
    %318 = vmatprep.mubr.f32.mxu0 0.0
    %319 = vmatmul.mubr.f32.gmra.mxu0 %v252
    %v320 = vpop.f32.mrf.mxu0
    %v321 = vadd.f32 %v248, %v320
    %v322 = vpop.f32.mrf.mxu0
    %323 = vdwg.mxu0
    %v324 = vmax.f32 %v321, 0.0
    %325 = vmatprep.subr.mxu0 0.0
    %326 = vmatpush1.msra.mxu0 0.0
    %327 = vmatprep.subr.mxu0 0.0
    %328 = vmatpush1.msra.mxu0 0.0
    %329 = vmatprep.subr.mxu0 0.0
    %330 = vmatpush1.msra.mxu0 0.0
    %331 = vmatprep.subr.mxu0 0.0
    %332 = vmatpush1.msra.mxu0 0.0
    %333 = vmatprep.subr.mxu0 0.0
    %334 = vmatpush1.msra.mxu0 0.0
    %335 = vmatprep.subr.mxu0 0.0
    %336 = vmatpush1.msra.mxu0 0.0
    %337 = vmatprep.subr.mxu0 0.0
    %338 = vmatpush1.msra.mxu0 0.0
    %339 = vmatprep.subr.mxu0 0.0
    %340 = vmatpush1.msra.mxu0 0.0
    %341 = vmatprep.subr.mxu0 0.0
    %342 = vmatpush1.msra.mxu0 0.0
    %343 = vmatprep.subr.mxu0 0.0
    %344 = vmatpush1.msra.mxu0 0.0
    %345 = vmatprep.subr.mxu0 0.0
    %346 = vmatpush1.msra.mxu0 0.0
    %347 = vmatprep.subr.mxu0 0.0
    %348 = vmatpush1.msra.mxu0 0.0
    %349 = vmatprep.subr.mxu0 0.0
    %350 = vmatpush1.msra.mxu0 0.0
    %351 = vmatprep.subr.mxu0 0.0
    %352 = vmatpush1.msra.mxu0 0.0
    %353 = vmatprep.subr.mxu0 0.0
    %354 = vmatpush1.msra.mxu0 %v154
    %355 = vmatprep.subr.mxu0 0.0
    %356 = vmatpush1.msra.mxu0 %v153
    %357 = vmatprep.subr.mxu0 0.0
    %358 = vmatpush2.msra.mxu0 0.0
    %359 = vmatprep.subr.mxu0 0.0
    %360 = vmatpush2.msra.mxu0 0.0
    %361 = vmatprep.subr.mxu0 0.0
    %362 = vmatpush2.msra.mxu0 0.0
    %363 = vmatprep.subr.mxu0 0.0
    %364 = vmatpush2.msra.mxu0 0.0
    %365 = vmatprep.subr.mxu0 0.0
    %366 = vmatpush2.msra.mxu0 0.0
    %367 = vmatprep.subr.mxu0 0.0
    %368 = vmatpush2.msra.mxu0 0.0
    %369 = vmatprep.subr.mxu0 0.0
    %370 = vmatpush2.msra.mxu0 0.0
    %371 = vmatprep.subr.mxu0 0.0
    %372 = vmatpush2.msra.mxu0 0.0
    %373 = vmatprep.subr.mxu0 0.0
    %374 = vmatpush2.msra.mxu0 0.0
    %375 = vmatprep.subr.mxu0 0.0
    %376 = vmatpush2.msra.mxu0 0.0
    %377 = vmatprep.subr.mxu0 0.0
    %378 = vmatpush2.msra.mxu0 0.0
    %379 = vmatprep.subr.mxu0 0.0
    %380 = vmatpush2.msra.mxu0 0.0
    %381 = vmatprep.subr.mxu0 0.0
    %382 = vmatpush2.msra.mxu0 0.0
    %383 = vmatprep.subr.mxu0 0.0
    %384 = vmatpush2.msra.mxu0 0.0
    %385 = vmatprep.subr.mxu0 0.0
    %386 = vmatpush2.msra.mxu0 0.0
    %387 = vmatprep.subr.mxu0 0.0
    %388 = vmatpush2.msra.mxu0 0.0
    %389 = vmatprep.mubr.f32.mxu0 0.0
    %390 = vmatmul.mubr.f32.gmra.mxu0 %v166
    %v391 = vpop.f32.mrf.mxu0
    %v392 = vadd.f32 0.0, %v391
    %v393 = vpop.f32.mrf.mxu0
    %394 = vdwg.mxu0
    %v395 = vld [vmem:[%s6] sm:$0xff]
    %v396 = vld [vmem:[%s6 + $0x8] sm:$0xff]
    %v397 = vld [vmem:[#allocation5] sm:$0x1]
    %v399 = vlaneseq
    %v400 = vshrl.u32 %v399, 7
    %v401 = vsub.s32 0, %v400
    %v402 = vrot.slane %v397, %v401
    %v405 = vsel %vm164, %v392, 0
    %407 = vmatprep.subr.mxu0 0.0
    %408 = vmatpush1.msra.mxu0 0.0
    %409 = vmatprep.subr.mxu0 0.0
    %410 = vmatpush1.msra.mxu0 0.0
    %411 = vmatprep.subr.mxu0 0.0
    %412 = vmatpush1.msra.mxu0 0.0
    %413 = vmatprep.subr.mxu0 0.0
    %414 = vmatpush1.msra.mxu0 0.0
    %415 = vmatprep.subr.mxu0 0.0
    %416 = vmatpush1.msra.mxu0 0.0
    %417 = vmatprep.subr.mxu0 0.0
    %418 = vmatpush1.msra.mxu0 0.0
    %419 = vmatprep.subr.mxu0 0.0
    %420 = vmatpush1.msra.mxu0 0.0
    %421 = vmatprep.subr.mxu0 0.0
    %422 = vmatpush1.msra.mxu0 0.0
    %423 = vmatprep.subr.mxu0 0.0
    %424 = vmatpush1.msra.mxu0 0.0
    %425 = vmatprep.subr.mxu0 0.0
    %426 = vmatpush1.msra.mxu0 0.0
    %427 = vmatprep.subr.mxu0 0.0
    %428 = vmatpush1.msra.mxu0 0.0
    %429 = vmatprep.subr.mxu0 0.0
    %430 = vmatpush1.msra.mxu0 0.0
    %431 = vmatprep.subr.mxu0 0.0
    %432 = vmatpush1.msra.mxu0 0.0
    %433 = vmatprep.subr.mxu0 0.0
    %434 = vmatpush1.msra.mxu0 0.0
    %435 = vmatprep.subr.mxu0 0.0
    %436 = vmatpush1.msra.mxu0 %v396
    %437 = vmatprep.subr.mxu0 0.0
    %438 = vmatpush1.msra.mxu0 %v395
    %439 = vmatprep.subr.mxu0 0.0
    %440 = vmatpush2.msra.mxu0 0.0
    %441 = vmatprep.subr.mxu0 0.0
    %442 = vmatpush2.msra.mxu0 0.0
    %443 = vmatprep.subr.mxu0 0.0
    %444 = vmatpush2.msra.mxu0 0.0
    %445 = vmatprep.subr.mxu0 0.0
    %446 = vmatpush2.msra.mxu0 0.0
    %447 = vmatprep.subr.mxu0 0.0
    %448 = vmatpush2.msra.mxu0 0.0
    %449 = vmatprep.subr.mxu0 0.0
    %450 = vmatpush2.msra.mxu0 0.0
    %451 = vmatprep.subr.mxu0 0.0
    %452 = vmatpush2.msra.mxu0 0.0
    %453 = vmatprep.subr.mxu0 0.0
    %454 = vmatpush2.msra.mxu0 0.0
    %455 = vmatprep.subr.mxu0 0.0
    %456 = vmatpush2.msra.mxu0 0.0
    %457 = vmatprep.subr.mxu0 0.0
    %458 = vmatpush2.msra.mxu0 0.0
    %459 = vmatprep.subr.mxu0 0.0
    %460 = vmatpush2.msra.mxu0 0.0
    %461 = vmatprep.subr.mxu0 0.0
    %462 = vmatpush2.msra.mxu0 0.0
    %463 = vmatprep.subr.mxu0 0.0
    %464 = vmatpush2.msra.mxu0 0.0
    %465 = vmatprep.subr.mxu0 0.0
    %466 = vmatpush2.msra.mxu0 0.0
    %467 = vmatprep.subr.mxu0 0.0
    %468 = vmatpush2.msra.mxu0 0.0
    %469 = vmatprep.subr.mxu0 0.0
    %470 = vmatpush2.msra.mxu0 0.0
    %471 = vmatprep.mubr.f32.mxu0 0.0
    %472 = vmatmul.mubr.f32.gmra.mxu0 %v405
    %v473 = vpop.f32.mrf.mxu0
    %v474 = vadd.f32 %v402, %v473
    %v475 = vpop.f32.mrf.mxu0
    %476 = vdwg.mxu0
    %v477 = vmax.f32 %v474, 0.0
    %v479 = vsel %vm164, %v477, 0
    %481 = vmatprep.subr.mxu0 0.0
    %482 = vmatpush1.msra.mxu0 0.0
    %483 = vmatprep.subr.mxu0 0.0
    %484 = vmatpush1.msra.mxu0 0.0
    %485 = vmatprep.subr.mxu0 0.0
    %486 = vmatpush1.msra.mxu0 0.0
    %487 = vmatprep.subr.mxu0 0.0
    %488 = vmatpush1.msra.mxu0 0.0
    %489 = vmatprep.subr.mxu0 0.0
    %490 = vmatpush1.msra.mxu0 0.0
    %491 = vmatprep.subr.mxu0 0.0
    %492 = vmatpush1.msra.mxu0 0.0
    %493 = vmatprep.subr.mxu0 0.0
    %494 = vmatpush1.msra.mxu0 0.0
    %495 = vmatprep.subr.mxu0 0.0
    %496 = vmatpush1.msra.mxu0 0.0
    %497 = vmatprep.subr.mxu0 0.0
    %498 = vmatpush1.msra.mxu0 0.0
    %499 = vmatprep.subr.mxu0 0.0
    %500 = vmatpush1.msra.mxu0 0.0
    %501 = vmatprep.subr.mxu0 0.0
    %502 = vmatpush1.msra.mxu0 0.0
    %503 = vmatprep.subr.mxu0 0.0
    %504 = vmatpush1.msra.mxu0 0.0
    %505 = vmatprep.subr.mxu0 0.0
    %506 = vmatpush1.msra.mxu0 0.0
    %507 = vmatprep.subr.mxu0 0.0
    %508 = vmatpush1.msra.mxu0 0.0
    %509 = vmatprep.subr.mxu0 0.0
    %510 = vmatpush1.msra.mxu0 %v154
    %511 = vmatprep.subr.mxu0 0.0
    %512 = vmatpush1.msra.mxu0 %v153
    %513 = vmatprep.subr.mxu0 0.0
    %514 = vmatpush2.msra.mxu0 0.0
    %515 = vmatprep.subr.mxu0 0.0
    %516 = vmatpush2.msra.mxu0 0.0
    %517 = vmatprep.subr.mxu0 0.0
    %518 = vmatpush2.msra.mxu0 0.0
    %519 = vmatprep.subr.mxu0 0.0
    %520 = vmatpush2.msra.mxu0 0.0
    %521 = vmatprep.subr.mxu0 0.0
    %522 = vmatpush2.msra.mxu0 0.0
    %523 = vmatprep.subr.mxu0 0.0
    %524 = vmatpush2.msra.mxu0 0.0
    %525 = vmatprep.subr.mxu0 0.0
    %526 = vmatpush2.msra.mxu0 0.0
    %527 = vmatprep.subr.mxu0 0.0
    %528 = vmatpush2.msra.mxu0 0.0
    %529 = vmatprep.subr.mxu0 0.0
    %530 = vmatpush2.msra.mxu0 0.0
    %531 = vmatprep.subr.mxu0 0.0
    %532 = vmatpush2.msra.mxu0 0.0
    %533 = vmatprep.subr.mxu0 0.0
    %534 = vmatpush2.msra.mxu0 0.0
    %535 = vmatprep.subr.mxu0 0.0
    %536 = vmatpush2.msra.mxu0 0.0
    %537 = vmatprep.subr.mxu0 0.0
    %538 = vmatpush2.msra.mxu0 0.0
    %539 = vmatprep.subr.mxu0 0.0
    %540 = vmatpush2.msra.mxu0 0.0
    %541 = vmatprep.subr.mxu0 0.0
    %542 = vmatpush2.msra.mxu0 0.0
    %543 = vmatprep.subr.mxu0 0.0
    %544 = vmatpush2.msra.mxu0 0.0
    %545 = vmatprep.mubr.f32.mxu0 0.0
    %546 = vmatmul.mubr.f32.gmra.mxu0 %v479
    %v547 = vpop.f32.mrf.mxu0
    %v548 = vadd.f32 0.0, %v547
    %v549 = vpop.f32.mrf.mxu0
    %550 = vdwg.mxu0
    %v551 = vld [vmem:[%s8] sm:$0xff]
    %v552 = vld [vmem:[%s8 + $0x8] sm:$0xff]
    %v553 = vld [vmem:[#allocation7] sm:$0x1]
    %v555 = vlaneseq
    %v556 = vshrl.u32 %v555, 7
    %v557 = vsub.s32 0, %v556
    %v558 = vrot.slane %v553, %v557
    %v561 = vsel %vm164, %v548, 0
    %563 = vmatprep.subr.mxu0 0.0
    %564 = vmatpush1.msra.mxu0 0.0
    %565 = vmatprep.subr.mxu0 0.0
    %566 = vmatpush1.msra.mxu0 0.0
    %567 = vmatprep.subr.mxu0 0.0
    %568 = vmatpush1.msra.mxu0 0.0
    %569 = vmatprep.subr.mxu0 0.0
    %570 = vmatpush1.msra.mxu0 0.0
    %571 = vmatprep.subr.mxu0 0.0
    %572 = vmatpush1.msra.mxu0 0.0
    %573 = vmatprep.subr.mxu0 0.0
    %574 = vmatpush1.msra.mxu0 0.0
    %575 = vmatprep.subr.mxu0 0.0
    %576 = vmatpush1.msra.mxu0 0.0
    %577 = vmatprep.subr.mxu0 0.0
    %578 = vmatpush1.msra.mxu0 0.0
    %579 = vmatprep.subr.mxu0 0.0
    %580 = vmatpush1.msra.mxu0 0.0
    %581 = vmatprep.subr.mxu0 0.0
    %582 = vmatpush1.msra.mxu0 0.0
    %583 = vmatprep.subr.mxu0 0.0
    %584 = vmatpush1.msra.mxu0 0.0
    %585 = vmatprep.subr.mxu0 0.0
    %586 = vmatpush1.msra.mxu0 0.0
    %587 = vmatprep.subr.mxu0 0.0
    %588 = vmatpush1.msra.mxu0 0.0
    %589 = vmatprep.subr.mxu0 0.0
    %590 = vmatpush1.msra.mxu0 0.0
    %591 = vmatprep.subr.mxu0 0.0
    %592 = vmatpush1.msra.mxu0 %v552
    %593 = vmatprep.subr.mxu0 0.0
    %594 = vmatpush1.msra.mxu0 %v551
    %595 = vmatprep.subr.mxu0 0.0
    %596 = vmatpush2.msra.mxu0 0.0
    %597 = vmatprep.subr.mxu0 0.0
    %598 = vmatpush2.msra.mxu0 0.0
    %599 = vmatprep.subr.mxu0 0.0
    %600 = vmatpush2.msra.mxu0 0.0
    %601 = vmatprep.subr.mxu0 0.0
    %602 = vmatpush2.msra.mxu0 0.0
    %603 = vmatprep.subr.mxu0 0.0
    %604 = vmatpush2.msra.mxu0 0.0
    %605 = vmatprep.subr.mxu0 0.0
    %606 = vmatpush2.msra.mxu0 0.0
    %607 = vmatprep.subr.mxu0 0.0
    %608 = vmatpush2.msra.mxu0 0.0
    %609 = vmatprep.subr.mxu0 0.0
    %610 = vmatpush2.msra.mxu0 0.0
    %611 = vmatprep.subr.mxu0 0.0
    %612 = vmatpush2.msra.mxu0 0.0
    %613 = vmatprep.subr.mxu0 0.0
    %614 = vmatpush2.msra.mxu0 0.0
    %615 = vmatprep.subr.mxu0 0.0
    %616 = vmatpush2.msra.mxu0 0.0
    %617 = vmatprep.subr.mxu0 0.0
    %618 = vmatpush2.msra.mxu0 0.0
    %619 = vmatprep.subr.mxu0 0.0
    %620 = vmatpush2.msra.mxu0 0.0
    %621 = vmatprep.subr.mxu0 0.0
    %622 = vmatpush2.msra.mxu0 0.0
    %623 = vmatprep.subr.mxu0 0.0
    %624 = vmatpush2.msra.mxu0 0.0
    %625 = vmatprep.subr.mxu0 0.0
    %626 = vmatpush2.msra.mxu0 0.0
    %627 = vmatprep.mubr.f32.mxu0 0.0
    %628 = vmatmul.mubr.f32.gmra.mxu0 %v561
    %v629 = vpop.f32.mrf.mxu0
    %v630 = vadd.f32 %v558, %v629
    %v631 = vpop.f32.mrf.mxu0
    %632 = vdwg.mxu0
    %v633 = vmax.f32 %v630, 0.0
    %v634 = vld [vmem:[%s10] sm:$0xff]
    %v635 = vld [vmem:[%s10 + $0x8] sm:$0xff]
    %v636 = vld [vmem:[#allocation8] sm:$0x1]
    %v638 = vlaneseq
    %v639 = vshrl.u32 %v638, 7
    %v640 = vsub.s32 0, %v639
    %v641 = vrot.slane %v636, %v640
    %v644 = vsel %vm164, %v633, 0
    %646 = vmatprep.subr.mxu0 0.0
    %647 = vmatpush1.msra.mxu0 0.0
    %648 = vmatprep.subr.mxu0 0.0
    %649 = vmatpush1.msra.mxu0 0.0
    %650 = vmatprep.subr.mxu0 0.0
    %651 = vmatpush1.msra.mxu0 0.0
    %652 = vmatprep.subr.mxu0 0.0
    %653 = vmatpush1.msra.mxu0 0.0
    %654 = vmatprep.subr.mxu0 0.0
    %655 = vmatpush1.msra.mxu0 0.0
    %656 = vmatprep.subr.mxu0 0.0
    %657 = vmatpush1.msra.mxu0 0.0
    %658 = vmatprep.subr.mxu0 0.0
    %659 = vmatpush1.msra.mxu0 0.0
    %660 = vmatprep.subr.mxu0 0.0
    %661 = vmatpush1.msra.mxu0 0.0
    %662 = vmatprep.subr.mxu0 0.0
    %663 = vmatpush1.msra.mxu0 0.0
    %664 = vmatprep.subr.mxu0 0.0
    %665 = vmatpush1.msra.mxu0 0.0
    %666 = vmatprep.subr.mxu0 0.0
    %667 = vmatpush1.msra.mxu0 0.0
    %668 = vmatprep.subr.mxu0 0.0
    %669 = vmatpush1.msra.mxu0 0.0
    %670 = vmatprep.subr.mxu0 0.0
    %671 = vmatpush1.msra.mxu0 0.0
    %672 = vmatprep.subr.mxu0 0.0
    %673 = vmatpush1.msra.mxu0 0.0
    %674 = vmatprep.subr.mxu0 0.0
    %675 = vmatpush1.msra.mxu0 %v635
    %676 = vmatprep.subr.mxu0 0.0
    %677 = vmatpush1.msra.mxu0 %v634
    %678 = vmatprep.subr.mxu0 0.0
    %679 = vmatpush2.msra.mxu0 0.0
    %680 = vmatprep.subr.mxu0 0.0
    %681 = vmatpush2.msra.mxu0 0.0
    %682 = vmatprep.subr.mxu0 0.0
    %683 = vmatpush2.msra.mxu0 0.0
    %684 = vmatprep.subr.mxu0 0.0
    %685 = vmatpush2.msra.mxu0 0.0
    %686 = vmatprep.subr.mxu0 0.0
    %687 = vmatpush2.msra.mxu0 0.0
    %688 = vmatprep.subr.mxu0 0.0
    %689 = vmatpush2.msra.mxu0 0.0
    %690 = vmatprep.subr.mxu0 0.0
    %691 = vmatpush2.msra.mxu0 0.0
    %692 = vmatprep.subr.mxu0 0.0
    %693 = vmatpush2.msra.mxu0 0.0
    %694 = vmatprep.subr.mxu0 0.0
    %695 = vmatpush2.msra.mxu0 0.0
    %696 = vmatprep.subr.mxu0 0.0
    %697 = vmatpush2.msra.mxu0 0.0
    %698 = vmatprep.subr.mxu0 0.0
    %699 = vmatpush2.msra.mxu0 0.0
    %700 = vmatprep.subr.mxu0 0.0
    %701 = vmatpush2.msra.mxu0 0.0
    %702 = vmatprep.subr.mxu0 0.0
    %703 = vmatpush2.msra.mxu0 0.0
    %704 = vmatprep.subr.mxu0 0.0
    %705 = vmatpush2.msra.mxu0 0.0
    %706 = vmatprep.subr.mxu0 0.0
    %707 = vmatpush2.msra.mxu0 0.0
    %708 = vmatprep.subr.mxu0 0.0
    %709 = vmatpush2.msra.mxu0 0.0
    %710 = vmatprep.mubr.f32.mxu0 0.0
    %711 = vmatmul.mubr.f32.gmra.mxu0 %v644
    %v712 = vpop.f32.mrf.mxu0
    %v713 = vadd.f32 %v641, %v712
    %v714 = vpop.f32.mrf.mxu0
    %715 = vdwg.mxu0
    %v716 = vmax.f32 %v713, 0.0
    %v717 = vld [vmem:[%s12] sm:$0xff]
    %v718 = vld [vmem:[%s12 + $0x8] sm:$0xff]
    %v719 = vld [vmem:[%s12 + $0x10] sm:$0xff]
    %v720 = vld [vmem:[%s12 + $0x18] sm:$0xff]
    %v721 = vld [vmem:[#allocation10] sm:$0x1]
    %v723 = vlaneseq
    %v724 = vshrl.u32 %v723, 7
    %v725 = vsub.s32 0, %v724
    %v726 = vrot.slane %v721, %v725
    %v729 = vsel %vm250, %v716, 0
    %731 = vmatprep.subr.mxu0 0.0
    %732 = vmatpush1.msra.mxu0 0.0
    %733 = vmatprep.subr.mxu0 0.0
    %734 = vmatpush1.msra.mxu0 0.0
    %735 = vmatprep.subr.mxu0 0.0
    %736 = vmatpush1.msra.mxu0 0.0
    %737 = vmatprep.subr.mxu0 0.0
    %738 = vmatpush1.msra.mxu0 0.0
    %739 = vmatprep.subr.mxu0 0.0
    %740 = vmatpush1.msra.mxu0 0.0
    %741 = vmatprep.subr.mxu0 0.0
    %742 = vmatpush1.msra.mxu0 0.0
    %743 = vmatprep.subr.mxu0 0.0
    %744 = vmatpush1.msra.mxu0 0.0
    %745 = vmatprep.subr.mxu0 0.0
    %746 = vmatpush1.msra.mxu0 0.0
    %747 = vmatprep.subr.mxu0 0.0
    %748 = vmatpush1.msra.mxu0 0.0
    %749 = vmatprep.subr.mxu0 0.0
    %750 = vmatpush1.msra.mxu0 0.0
    %751 = vmatprep.subr.mxu0 0.0
    %752 = vmatpush1.msra.mxu0 0.0
    %753 = vmatprep.subr.mxu0 0.0
    %754 = vmatpush1.msra.mxu0 0.0
    %755 = vmatprep.subr.mxu0 0.0
    %756 = vmatpush1.msra.mxu0 %v720
    %757 = vmatprep.subr.mxu0 0.0
    %758 = vmatpush1.msra.mxu0 %v719
    %759 = vmatprep.subr.mxu0 0.0
    %760 = vmatpush1.msra.mxu0 %v718
    %761 = vmatprep.subr.mxu0 0.0
    %762 = vmatpush1.msra.mxu0 %v717
    %763 = vmatprep.subr.mxu0 0.0
    %764 = vmatpush2.msra.mxu0 0.0
    %765 = vmatprep.subr.mxu0 0.0
    %766 = vmatpush2.msra.mxu0 0.0
    %767 = vmatprep.subr.mxu0 0.0
    %768 = vmatpush2.msra.mxu0 0.0
    %769 = vmatprep.subr.mxu0 0.0
    %770 = vmatpush2.msra.mxu0 0.0
    %771 = vmatprep.subr.mxu0 0.0
    %772 = vmatpush2.msra.mxu0 0.0
    %773 = vmatprep.subr.mxu0 0.0
    %774 = vmatpush2.msra.mxu0 0.0
    %775 = vmatprep.subr.mxu0 0.0
    %776 = vmatpush2.msra.mxu0 0.0
    %777 = vmatprep.subr.mxu0 0.0
    %778 = vmatpush2.msra.mxu0 0.0
    %779 = vmatprep.subr.mxu0 0.0
    %780 = vmatpush2.msra.mxu0 0.0
    %781 = vmatprep.subr.mxu0 0.0
    %782 = vmatpush2.msra.mxu0 0.0
    %783 = vmatprep.subr.mxu0 0.0
    %784 = vmatpush2.msra.mxu0 0.0
    %785 = vmatprep.subr.mxu0 0.0
    %786 = vmatpush2.msra.mxu0 0.0
    %787 = vmatprep.subr.mxu0 0.0
    %788 = vmatpush2.msra.mxu0 0.0
    %789 = vmatprep.subr.mxu0 0.0
    %790 = vmatpush2.msra.mxu0 0.0
    %791 = vmatprep.subr.mxu0 0.0
    %792 = vmatpush2.msra.mxu0 0.0
    %793 = vmatprep.subr.mxu0 0.0
    %794 = vmatpush2.msra.mxu0 0.0
    %795 = vmatprep.mubr.f32.mxu0 0.0
    %796 = vmatmul.mubr.f32.gmra.mxu0 %v729
    %v797 = vpop.f32.mrf.mxu0
    %v798 = vadd.f32 %v726, %v797
    %v799 = vpop.f32.mrf.mxu0
    %800 = vdwg.mxu0
    %v801 = vmax.f32 %v798, 0.0
    %v802 = vld [vmem:[#allocation11] sm:$0xff]
    %v803 = vld [vmem:[#allocation11 + $0x8] sm:$0xff]
    %v804 = vld [vmem:[#allocation13] sm:$0xff]
    %vm805 = vcmask 64512
    %v807 = vsel %vm805, %v801, 0
    %809 = vmatprep.subr.mxu0 0.0
    %810 = vmatpush1.msra.mxu0 0.0
    %811 = vmatprep.subr.mxu0 0.0
    %812 = vmatpush1.msra.mxu0 0.0
    %813 = vmatprep.subr.mxu0 0.0
    %814 = vmatpush1.msra.mxu0 0.0
    %815 = vmatprep.subr.mxu0 0.0
    %816 = vmatpush1.msra.mxu0 0.0
    %817 = vmatprep.subr.mxu0 0.0
    %818 = vmatpush1.msra.mxu0 0.0
    %819 = vmatprep.subr.mxu0 0.0
    %820 = vmatpush1.msra.mxu0 0.0
    %821 = vmatprep.subr.mxu0 0.0
    %822 = vmatpush1.msra.mxu0 0.0
    %823 = vmatprep.subr.mxu0 0.0
    %824 = vmatpush1.msra.mxu0 0.0
    %825 = vmatprep.subr.mxu0 0.0
    %826 = vmatpush1.msra.mxu0 0.0
    %827 = vmatprep.subr.mxu0 0.0
    %828 = vmatpush1.msra.mxu0 0.0
    %829 = vmatprep.subr.mxu0 0.0
    %830 = vmatpush1.msra.mxu0 0.0
    %831 = vmatprep.subr.mxu0 0.0
    %832 = vmatpush1.msra.mxu0 0.0
    %833 = vmatprep.subr.mxu0 0.0
    %834 = vmatpush1.msra.mxu0 0.0
    %835 = vmatprep.subr.mxu0 0.0
    %836 = vmatpush1.msra.mxu0 0.0
    %837 = vmatprep.subr.mxu0 0.0
    %838 = vmatpush1.msra.mxu0 0.0
    %839 = vmatprep.subr.mxu0 0.0
    %840 = vmatpush1.msra.mxu0 %v804
    %841 = vmatprep.subr.mxu0 0.0
    %842 = vmatpush2.msra.mxu0 0.0
    %843 = vmatprep.subr.mxu0 0.0
    %844 = vmatpush2.msra.mxu0 0.0
    %845 = vmatprep.subr.mxu0 0.0
    %846 = vmatpush2.msra.mxu0 0.0
    %847 = vmatprep.subr.mxu0 0.0
    %848 = vmatpush2.msra.mxu0 0.0
    %849 = vmatprep.subr.mxu0 0.0
    %850 = vmatpush2.msra.mxu0 0.0
    %851 = vmatprep.subr.mxu0 0.0
    %852 = vmatpush2.msra.mxu0 0.0
    %853 = vmatprep.subr.mxu0 0.0
    %854 = vmatpush2.msra.mxu0 0.0
    %855 = vmatprep.subr.mxu0 0.0
    %856 = vmatpush2.msra.mxu0 0.0
    %857 = vmatprep.subr.mxu0 0.0
    %858 = vmatpush2.msra.mxu0 0.0
    %859 = vmatprep.subr.mxu0 0.0
    %860 = vmatpush2.msra.mxu0 0.0
    %861 = vmatprep.subr.mxu0 0.0
    %862 = vmatpush2.msra.mxu0 0.0
    %863 = vmatprep.subr.mxu0 0.0
    %864 = vmatpush2.msra.mxu0 0.0
    %865 = vmatprep.subr.mxu0 0.0
    %866 = vmatpush2.msra.mxu0 0.0
    %867 = vmatprep.subr.mxu0 0.0
    %868 = vmatpush2.msra.mxu0 0.0
    %869 = vmatprep.subr.mxu0 0.0
    %870 = vmatpush2.msra.mxu0 0.0
    %871 = vmatprep.subr.mxu0 0.0
    %872 = vmatpush2.msra.mxu0 0.0
    %873 = vmatprep.mubr.f32.mxu0 0.0
    %874 = vmatmul.mubr.f32.gmra.mxu0 %v807
    %v875 = vpop.f32.mrf.mxu0
    %v876 = vadd.f32 0.0, %v875
    %v877 = vpop.f32.mrf.mxu0
    %878 = vdwg.mxu0
    %v880 = vsel %vm164, %v324, 0
    %882 = vmatprep.subr.mxu0 0.0
    %883 = vmatpush1.msra.mxu0 0.0
    %884 = vmatprep.subr.mxu0 0.0
    %885 = vmatpush1.msra.mxu0 0.0
    %886 = vmatprep.subr.mxu0 0.0
    %887 = vmatpush1.msra.mxu0 0.0
    %888 = vmatprep.subr.mxu0 0.0
    %889 = vmatpush1.msra.mxu0 0.0
    %890 = vmatprep.subr.mxu0 0.0
    %891 = vmatpush1.msra.mxu0 0.0
    %892 = vmatprep.subr.mxu0 0.0
    %893 = vmatpush1.msra.mxu0 0.0
    %894 = vmatprep.subr.mxu0 0.0
    %895 = vmatpush1.msra.mxu0 0.0
    %896 = vmatprep.subr.mxu0 0.0
    %897 = vmatpush1.msra.mxu0 0.0
    %898 = vmatprep.subr.mxu0 0.0
    %899 = vmatpush1.msra.mxu0 0.0
    %900 = vmatprep.subr.mxu0 0.0
    %901 = vmatpush1.msra.mxu0 0.0
    %902 = vmatprep.subr.mxu0 0.0
    %903 = vmatpush1.msra.mxu0 0.0
    %904 = vmatprep.subr.mxu0 0.0
    %905 = vmatpush1.msra.mxu0 0.0
    %906 = vmatprep.subr.mxu0 0.0
    %907 = vmatpush1.msra.mxu0 0.0
    %908 = vmatprep.subr.mxu0 0.0
    %909 = vmatpush1.msra.mxu0 0.0
    %910 = vmatprep.subr.mxu0 0.0
    %911 = vmatpush1.msra.mxu0 %v803
    %912 = vmatprep.subr.mxu0 0.0
    %913 = vmatpush1.msra.mxu0 %v802
    %914 = vmatprep.subr.mxu0 0.0
    %915 = vmatpush2.msra.mxu0 0.0
    %916 = vmatprep.subr.mxu0 0.0
    %917 = vmatpush2.msra.mxu0 0.0
    %918 = vmatprep.subr.mxu0 0.0
    %919 = vmatpush2.msra.mxu0 0.0
    %920 = vmatprep.subr.mxu0 0.0
    %921 = vmatpush2.msra.mxu0 0.0
    %922 = vmatprep.subr.mxu0 0.0
    %923 = vmatpush2.msra.mxu0 0.0
    %924 = vmatprep.subr.mxu0 0.0
    %925 = vmatpush2.msra.mxu0 0.0
    %926 = vmatprep.subr.mxu0 0.0
    %927 = vmatpush2.msra.mxu0 0.0
    %928 = vmatprep.subr.mxu0 0.0
    %929 = vmatpush2.msra.mxu0 0.0
    %930 = vmatprep.subr.mxu0 0.0
    %931 = vmatpush2.msra.mxu0 0.0
    %932 = vmatprep.subr.mxu0 0.0
    %933 = vmatpush2.msra.mxu0 0.0
    %934 = vmatprep.subr.mxu0 0.0
    %935 = vmatpush2.msra.mxu0 0.0
    %936 = vmatprep.subr.mxu0 0.0
    %937 = vmatpush2.msra.mxu0 0.0
    %938 = vmatprep.subr.mxu0 0.0
    %939 = vmatpush2.msra.mxu0 0.0
    %940 = vmatprep.subr.mxu0 0.0
    %941 = vmatpush2.msra.mxu0 0.0
    %942 = vmatprep.subr.mxu0 0.0
    %943 = vmatpush2.msra.mxu0 0.0
    %944 = vmatprep.subr.mxu0 0.0
    %945 = vmatpush2.msra.mxu0 0.0
    %946 = vmatprep.mubr.f32.mxu0 0.0
    %947 = vmatmul.mubr.f32.gmra.mxu0 %v880
    %v948 = vpop.f32.mrf.mxu0
    %v949 = vadd.f32 %v876, %v948
    %v950 = vpop.f32.mrf.mxu0
    %951 = vdwg.mxu0
    %v952 = vld [vmem:[#allocation14] sm:$0x1]
    %v954 = vlaneseq
    %v955 = vshrl.u32 %v954, 7
    %v956 = vsub.s32 0, %v955
    %v957 = vrot.slane %v952, %v956
    %v959 = vadd.f32 %v949, %v957
    %v960 = vmax.f32 %v959, 0.0
    %961 = vst.msk [vmem:[#allocation16] sm:$0xff] %vm164, %v960
    // Predicated region
    $region102: #{graph_mlp_forward.1} parent=1 // pred_check
      _
    $region103: #{graph_mlp_forward.1} parent=1 // pred_check_branch
      %963 = sbr.rel (0) target = $region105
    $region104: #{graph_mlp_forward.1} parent=1 // pred_region
      %s965 = ssub.s32 128, 128
      %966 = vsyncadd [#allocation4], %s965
      %s968 = sshll.u32 [#allocation16], 4
      %s969 = int_to_ptr.vmem [resolvable:$true] %s968
      %971 = dma.vmem_to_hbm [thread:$0]  %s969, 128, %s17, [#allocation4]
    $region105: #{graph_mlp_forward.1} parent=1 // pred_fallthru
      _
    // Predicated region
    $region106: #{graph_mlp_forward.1} parent=1 // pred_check
      _
    $region107: #{graph_mlp_forward.1} parent=1 // pred_check_branch
      %973 = sbr.rel (0) target = $region109
    $region108: #{graph_mlp_forward.1} parent=1 // pred_region
      %974 = dma.done [#allocation4], 128
    $region109: #{graph_mlp_forward.1} parent=1 // pred_fallthru
      _
    %975 = vsyncpa [#allocation3], 1
    %976 = vsyncpa [#allocation6], 1
    %977 = vsyncpa [#allocation9], 1
    %978 = vsyncpa [#allocation12], 1
    %979 = vsyncpa [#allocation15], 1
    %980 = vsyncpa [#allocation4], 1

</llo_original>
